<compile_context>
chip_gen: v6e
topology: v6e:2x2x1
jax: 0.10.0
libtpu: 0.0.40
codegen_flags: <defaults>
</compile_context>

<pallas_src>
import functools

import jax
import jax.numpy as jnp
from jax.experimental import pallas as pl
from jax.experimental.pallas import tpu as pltpu


def _round_up(x, m):
    return ((x + m - 1) // m) * m


def _label_smoothing_kernel(pred_ref, target_ref, dist_ref, rowloss_ref, *,
                            classes_target, classes, smoothing,
                            total_rows, block_rows):
    confidence = jnp.float32(1.0 - smoothing)
    smooth_val = jnp.float32(smoothing / (classes - 10))
    zero = jnp.float32(0.0)

    pred = pred_ref[...].astype(jnp.float32)     # (TB, C)
    tgt = target_ref[...]                        # (TB, 1) int32
    TB, C = pred.shape
    n_tail = C - classes_target                  # == classes - 10

    # --- shifted logits + log-sum-exp along the class (lane) axis ---
    m = jnp.max(pred, axis=-1, keepdims=True)
    shifted = pred - m
    lse = jnp.log(jnp.sum(jnp.exp(shifted), axis=-1, keepdims=True))   # (TB, 1)
    # log_probs = shifted - lse  (never materialized; folded into the loss below)

    # --- smoothed label distribution (scatter via iota compare) ---
    col = jax.lax.broadcasted_iota(jnp.int32, (TB, C), 1)
    tail_mask = col >= classes_target            # classes that get smooth_val
    tgt_mask = col == tgt                        # scatter position
    base = jnp.where(tail_mask, smooth_val, zero)
    true_dist = jnp.where(tgt_mask, confidence, base)
    dist_ref[...] = true_dist

    # --- per-row loss:
    #   loss_b = sum_c -td*(shifted - lse) = -( sum_c td*shifted - lse * sum_c td )
    #   sum_c td = confidence + smooth_val * (n_tail - [tgt >= classes_target])
    td_dot_shifted = jnp.sum(true_dist * shifted, axis=-1, keepdims=True)   # (TB, 1)
    tgt_in_tail = (tgt >= classes_target).astype(jnp.float32)               # (TB, 1)
    sum_td = confidence + smooth_val * (jnp.float32(n_tail) - tgt_in_tail)  # (TB, 1)
    per_row = -(td_dot_shifted - lse * sum_td)                              # (TB, 1)

    # Mask rows past the real batch (partial boundary block reads garbage; the
    # select keeps any NaN there from reaching the summed output).
    row = jax.lax.broadcasted_iota(jnp.int32, (TB, 1), 0)
    valid = (pl.program_id(0) * block_rows + row) < total_rows
    rowloss_ref[...] = jnp.where(valid, per_row, zero)


def label_smoothing_loss(pred, target, *, classes_target, classes, smoothing):
    B, C = pred.shape
    assert classes != 10, "smoothing / (classes - 10) divides by zero"
    assert C == classes_target + (classes - 10), \
        "pred width must match label dist width"

    in_bytes = jnp.dtype(pred.dtype).itemsize
    # bf16 packs 2 rows per sublane; 8-bit dtypes pack 4.
    row_align = 8 if in_bytes >= 4 else (16 if in_bytes == 2 else 32)

    # --- generation-aware VMEM budget (v5e/v6e: 128 MiB, v7x: 64 MiB per TC) ---
    try:
        info = pltpu.get_tpu_info()
        vmem_cap = int(getattr(info, "vmem_capacity_bytes", 64 * 1024 * 1024))
    except Exception:
        vmem_cap = 64 * 1024 * 1024
    vmem_limit = min(vmem_cap * 3 // 4, 96 * 1024 * 1024)   # 96 MiB v5e/v6e, 48 MiB v7x

    # Per-row VMEM footprint: double-buffered pred (input dtype) + true_dist (f32)
    # DMA tiles, plus ~4 live f32 (TB, C) temporaries in the kernel body.
    bytes_per_row = 2 * C * in_bytes + 2 * C * 4 + 4 * C * 4 + 64
    budget = max(vmem_limit - 4 * 1024 * 1024, 2 * 1024 * 1024)
    tb = budget // max(bytes_per_row, 1)
    tb = max(row_align, min(4096, tb))
    tb = (tb // row_align) * row_align
    tb = min(tb, _round_up(B, row_align))            # never larger than the batch
    if B > row_align:                                # >=2 grid steps -> both v7x TCs busy
        tb = min(tb, max(row_align, _round_up(pl.cdiv(B, 2), row_align)))
    num_tiles = pl.cdiv(B, tb)                       # partial last block is handled by Pallas

    tgt2d = target.reshape(B, 1).astype(jnp.int32)

    kernel = functools.partial(
        _label_smoothing_kernel,
        classes_target=classes_target,
        classes=classes,
        smoothing=smoothing,
        total_rows=B,
        block_rows=tb,
    )

    cost = pl.CostEstimate(
        flops=8 * B * C,
        transcendentals=B * C,
        bytes_accessed=B * C * (in_bytes + 4) + 8 * B,
    )

    true_dist, rowloss = pl.pallas_call(
        kernel,
        out_shape=(
            jax.ShapeDtypeStruct((B, C), jnp.float32),   # true_dist (f32 parity)
            jax.ShapeDtypeStruct((B, 1), jnp.float32),   # per-row loss
        ),
        grid=(num_tiles,),
        in_specs=[
            pl.BlockSpec((tb, C), lambda i: (i, 0)),     # pred batch tile
            pl.BlockSpec((tb, 1), lambda i: (i, 0)),     # target column tile
        ],
        out_specs=(
            pl.BlockSpec((tb, C), lambda i: (i, 0)),     # true_dist tile
            pl.BlockSpec((tb, 1), lambda i: (i, 0)),     # per-row loss tile
        ),
        compiler_params=pltpu.CompilerParams(
            dimension_semantics=("parallel",),           # shards tiles over TCs on v7x
            vmem_limit_bytes=int(vmem_limit),
        ),
        cost_estimate=cost,
    )(pred, tgt2d)

    loss = jnp.sum(rowloss) / jnp.float32(B)             # invalid rows were zeroed / masked
    return loss, true_dist


def _reference(pred, target, *, classes_target, classes, smoothing):
    # Pure-JAX reference matching the PyTorch forward.
    B, C = pred.shape
    log_probs = jax.nn.log_softmax(pred.astype(jnp.float32), axis=-1)
    col = jnp.arange(C)[None, :]
    base = jnp.where(col >= classes_target, smoothing / (classes - 10), 0.0)
    base = jnp.broadcast_to(base, (B, C)).astype(jnp.float32)
    true_dist = jnp.where(col == target[:, None], 1.0 - smoothing, base)
    loss = jnp.mean(jnp.sum(-true_dist * log_probs, axis=-1))
    return loss, true_dist


if __name__ == "__main__":
    # Small, deterministic example consistent with the module:
    #   classes_target = 16, classes = 26  ->  C = 16 + (26 - 10) = 32
    # B = 24 exercises the multi-tile + partial-boundary-block path.
    B = 24
    classes_target = 16
    classes = 26
    C = classes_target + (classes - 10)
    smoothing = 0.1

    key = jax.random.PRNGKey(0)
    kp, kt = jax.random.split(key)
    pred = jax.random.normal(kp, (B, C), dtype=jnp.float32)
    target = jax.random.randint(kt, (B,), 0, C, dtype=jnp.int32)

    loss, true_dist = label_smoothing_loss(
        pred, target,
        classes_target=classes_target, classes=classes, smoothing=smoothing)
    loss = jax.block_until_ready(loss)
    true_dist = jax.block_until_ready(true_dist)

    ref_loss, ref_dist = _reference(
        pred, target,
        classes_target=classes_target, classes=classes, smoothing=smoothing)

    assert jnp.allclose(loss, ref_loss, atol=1e-5, rtol=1e-5), (loss, ref_loss)
    assert jnp.allclose(true_dist, ref_dist, atol=1e-6), "true_dist mismatch"

    print("KERNEL_OK")
</pallas_src>

<mosaic_0001>
module attributes {stable_mosaic.version = 11 : i64} {
  func.func @_label_smoothing_kernel(%arg0: i32, %arg1: memref<16x32xf32, #tpu.memory_space<vmem>>, %arg2: memref<16x1xi32, #tpu.memory_space<vmem>>, %arg3: memref<16x32xf32, #tpu.memory_space<vmem>>, %arg4: memref<16x1xf32, #tpu.memory_space<vmem>>) attributes {dimension_semantics = [#tpu.dimension_semantics<parallel>], iteration_bounds = array<i64: 2>, scalar_prefetch = 0 : i64, scratch_operands = 0 : i64, tpu.core_type = #tpu.core_type<tc>, window_params = [{transform_indices = @transform_0, window_bounds = array<i64: 16, 32>}, {transform_indices = @transform_1, window_bounds = array<i64: 16, 1>}, {transform_indices = @transform_2, window_bounds = array<i64: 16, 32>}, {transform_indices = @transform_3, window_bounds = array<i64: 16, 1>}]} {
    %c0 = arith.constant 0 : index
    %c0_0 = arith.constant 0 : index
    %0 = vector.load %arg1[%c0, %c0_0] : memref<16x32xf32, #tpu.memory_space<vmem>>, vector<16x32xf32>
    %c0_1 = arith.constant 0 : index
    %c0_2 = arith.constant 0 : index
    %1 = vector.load %arg2[%c0_1, %c0_2] : memref<16x1xi32, #tpu.memory_space<vmem>>, vector<16x1xi32>
    %cst = arith.constant dense<0xFF800000> : vector<16xf32>
    %2 = vector.multi_reduction <maximumf>, %0, %cst [1] : vector<16x32xf32> to vector<16xf32>
    %3 = vector.shape_cast %2 : vector<16xf32> to vector<16x1xf32>
    %4 = vector.broadcast %3 : vector<16x1xf32> to vector<16x32xf32>
    %5 = arith.subf %0, %4 : vector<16x32xf32>
    %6 = math.exp %5 : vector<16x32xf32>
    %cst_3 = arith.constant dense<0.000000e+00> : vector<16xf32>
    %7 = vector.multi_reduction <add>, %6, %cst_3 [1] : vector<16x32xf32> to vector<16xf32>
    %8 = vector.shape_cast %7 : vector<16xf32> to vector<16x1xf32>
    %9 = math.log %8 : vector<16x1xf32>
    %10 = tpu.iota {dimensions = array<i32: 1>} : vector<16x32xi32>
    %c16_i32 = arith.constant 16 : i32
    %11 = vector.broadcast %c16_i32 : i32 to vector<16x32xi32>
    %12 = arith.cmpi sge, %10, %11 : vector<16x32xi32>
    %13 = vector.broadcast %1 : vector<16x1xi32> to vector<16x32xi32>
    %14 = arith.cmpi eq, %10, %13 : vector<16x32xi32>
    %cst_4 = arith.constant 6.250000e-03 : f32
    %cst_5 = arith.constant 0.000000e+00 : f32
    %15 = vector.broadcast %cst_4 : f32 to vector<16x32xf32>
    %16 = vector.broadcast %cst_5 : f32 to vector<16x32xf32>
    %17 = arith.select %12, %15, %16 : vector<16x32xi1>, vector<16x32xf32>
    %cst_6 = arith.constant 0.899999976 : f32
    %18 = vector.broadcast %cst_6 : f32 to vector<16x32xf32>
    %19 = arith.select %14, %18, %17 : vector<16x32xi1>, vector<16x32xf32>
    %c0_7 = arith.constant 0 : index
    %c0_8 = arith.constant 0 : index
    %20 = vector.load %arg3[%c0_7, %c0_8] : memref<16x32xf32, #tpu.memory_space<vmem>>, vector<16x32xf32>
    tpu.vector_store %arg3[%c0_7, %c0_8], %19 {strides = array<i32>} : memref<16x32xf32, #tpu.memory_space<vmem>>, vector<16x32xf32>,
    %21 = arith.mulf %19, %5 : vector<16x32xf32>
    %cst_9 = arith.constant dense<0.000000e+00> : vector<16xf32>
    %22 = vector.multi_reduction <add>, %21, %cst_9 [1] : vector<16x32xf32> to vector<16xf32>
    %23 = vector.shape_cast %22 : vector<16xf32> to vector<16x1xf32>
    %c16_i32_10 = arith.constant 16 : i32
    %24 = vector.broadcast %c16_i32_10 : i32 to vector<16x1xi32>
    %25 = arith.cmpi sge, %1, %24 : vector<16x1xi32>
    %26 = arith.extui %25 : vector<16x1xi1> to vector<16x1xi32>
    %27 = arith.sitofp %26 : vector<16x1xi32> to vector<16x1xf32>
    %cst_11 = arith.constant 1.600000e+01 : f32
    %28 = vector.broadcast %cst_11 : f32 to vector<16x1xf32>
    %29 = arith.subf %28, %27 : vector<16x1xf32>
    %cst_12 = arith.constant 6.250000e-03 : f32
    %30 = vector.broadcast %cst_12 : f32 to vector<16x1xf32>
    %31 = arith.mulf %30, %29 : vector<16x1xf32>
    %cst_13 = arith.constant 0.899999976 : f32
    %32 = vector.broadcast %cst_13 : f32 to vector<16x1xf32>
    %33 = arith.addf %32, %31 : vector<16x1xf32>
    %34 = arith.mulf %9, %33 : vector<16x1xf32>
    %35 = arith.subf %23, %34 : vector<16x1xf32>
    %cst_14 = arith.constant 0.000000e+00 : f32
    %36 = vector.broadcast %cst_14 : f32 to vector<16x1xf32>
    %37 = arith.subf %36, %35 : vector<16x1xf32>
    %38 = tpu.iota {dimensions = array<i32: 0>} : vector<16x1xi32>
    %c16_i32_15 = arith.constant 16 : i32
    %39 = arith.muli %arg0, %c16_i32_15 : i32
    %40 = vector.broadcast %39 : i32 to vector<16x1xi32>
    %41 = arith.addi %40, %38 : vector<16x1xi32>
    %c24_i32 = arith.constant 24 : i32
    %42 = vector.broadcast %c24_i32 : i32 to vector<16x1xi32>
    %43 = arith.cmpi slt, %41, %42 : vector<16x1xi32>
    %cst_16 = arith.constant 0.000000e+00 : f32
    %44 = vector.broadcast %cst_16 : f32 to vector<16x1xf32>
    %45 = arith.select %43, %37, %44 : vector<16x1xi1>, vector<16x1xf32>
    %c0_17 = arith.constant 0 : index
    %c0_18 = arith.constant 0 : index
    %46 = vector.load %arg4[%c0_17, %c0_18] : memref<16x1xf32, #tpu.memory_space<vmem>>, vector<16x1xf32>
    tpu.vector_store %arg4[%c0_17, %c0_18], %45 {strides = array<i32>} : memref<16x1xf32, #tpu.memory_space<vmem>>, vector<16x1xf32>,
    return
  }
  func.func @transform_0(%arg0: i32) -> (i32, i32) {
    %c0_i32 = arith.constant 0 : i32
    %c0_i32_0 = arith.constant 0 : i32
    return %arg0, %c0_i32 : i32, i32
  }
  func.func @transform_1(%arg0: i32) -> (i32, i32) {
    %c0_i32 = arith.constant 0 : i32
    %c0_i32_0 = arith.constant 0 : i32
    return %arg0, %c0_i32 : i32, i32
  }
  func.func @transform_2(%arg0: i32) -> (i32, i32) {
    %c0_i32 = arith.constant 0 : i32
    %c0_i32_0 = arith.constant 0 : i32
    return %arg0, %c0_i32 : i32, i32
  }
  func.func @transform_3(%arg0: i32) -> (i32, i32) {
    %c0_i32 = arith.constant 0 : i32
    %c0_i32_0 = arith.constant 0 : i32
    return %arg0, %c0_i32 : i32, i32
  }
}

</mosaic_0001>

<llo_original>
// kernel: tpu_custom_call.1
$region0: #{tpu_custom_call.1}
  #allocation0 [shape = 'u32[]', space=smem, size = 0x4, offset = 0x4, fixed_abs, tag = 'smem constant byte address 0x4 - core index']
  #allocation1 [shape = 'u32[144,128]{1,0:T(1,128)}', space=vmem, size = 0x12000, scoped, tag = 'internal scratch']
  %s0 = inlined_call_operand.vmem [shape: f32[24,32], index: 0, kind: input, shape index: {}]
  %s1 = inlined_call_operand.vmem [shape: s32[24,1], index: 1, kind: input, shape index: {}]
  %s2 = inlined_call_operand.hbm [shape: f32[24,32], index: 2, kind: output, shape index: {0}]
  %s3 = inlined_call_operand.vmem [shape: f32[24,1], index: 3, kind: output, shape index: {1}]
  %4 = xla_tuple %s2, %s3
  %s5 = sld [smem:[#allocation0]]
  $region97: #{tpu_custom_call.1} parent=0
    _
  %s7 = ssub.s32 1, %s5
  %s8 = scalar_select 0, %s7, %s5
  $region1: #{tpu_custom_call.1} parent=0
    #allocation2 [shape = 'u8[16384]{0}', space=vmem, size = 0x4000, scoped, tag = 'output window, operand 0']
    #allocation3 [shape = 's32[2]{0}', space=sflag, size = 0x8, scoped, tag = 'scoped memory for tpu_custom_call.1']
    #allocation4 [shape = 'u8[16384]{0}', space=vmem, size = 0x4000, scoped, tag = 'output window, operand 1']
    %9 = vsyncpa [#allocation3], 0
    %s10 = scalar_lea.sflag [#allocation3], 1
    %11 = vsyncpa %s10, 0
    loop: start=0, step=1, limit=4
    $region2: #{tpu_custom_call.1} parent=1 // loop_pre_header
      _
    $region3: #{tpu_custom_call.1} parent=1 // loop_header
      %s13 = sphi 0, %s17
      %p14 = scmp.ge.s32.totalorder %s13, 4
      %s23 = sphi 0, %s25
      %s26 = sphi 0, %s23
      %s27 = sphi 0, %s26
      %s43 = sphi 0, %s27
      %s49 = sphi 0, %s51
      %s52 = sphi 0, %s49
      %s53 = sphi 0, %s52
      %s69 = sphi 0, %s53
      %s75 = sphi 0, %s77
      %s78 = sphi 0, %s75
      %s79 = sphi 0, %s78
      %s95 = sphi 0, %s79
      %s101 = sphi 0, %s103
      %s104 = sphi 0, %s101
      %s105 = sphi 0, %s104
      %s121 = sphi 0, %s105
    $region4: #{tpu_custom_call.1} parent=1 // loop_header_branch
      %16 = sbr.rel (%p14) target = $region8
    $region5: #{tpu_custom_call.1} parent=1 // loop_body
      %s18 = ssub.s32 %s13, 1
      %s19 = ssub.s32 %s13, 2
      %s20 = sadd.s32 %s13, 1
      %s21 = ssub.s32 %s13, %s20
      %p22 = scmp.eq.s32.totalorder %s21, 0
      %s24 = sadd.s32 %s23, 1
      %s25 = scalar_select %p22, %s23, %s24
      %p28 = pneg %p22
      %p29 = scmp.eq.s32.totalorder %s13, 1
      %p30 = por %p28, %p29
      %p31 = scmp.ne.s32.totalorder %s23, %s26
      %p32 = scmp.eq.s32.totalorder %s13, 0
      %p33 = por %p31, %p32
      %p34 = scmp.ne.s32.totalorder %s23, %s26
      %p35 = scmp.eq.s32.totalorder %s18, 1
      %p36 = por %p34, %p35
      %p37 = scmp.ne.s32.totalorder %s26, %s27
      %p38 = scmp.eq.s32.totalorder %s18, 0
      %p39 = por %p37, %p38
      %p40 = scmp.ne.s32.totalorder %s26, %s27
      %p41 = scmp.eq.s32.totalorder %s19, 1
      %p42 = por %p40, %p41
      %p44 = scmp.ne.s32.totalorder %s27, %s43
      %p45 = scmp.eq.s32.totalorder %s19, 0
      %p46 = por %p44, %p45
      %s47 = ssub.s32 %s13, %s20
      %p48 = scmp.eq.s32.totalorder %s47, 0
      %s50 = sadd.s32 %s49, 1
      %s51 = scalar_select %p48, %s49, %s50
      %p54 = pneg %p48
      %p55 = scmp.eq.s32.totalorder %s13, 1
      %p56 = por %p54, %p55
      %p57 = scmp.ne.s32.totalorder %s49, %s52
      %p58 = scmp.eq.s32.totalorder %s13, 0
      %p59 = por %p57, %p58
      %p60 = scmp.ne.s32.totalorder %s49, %s52
      %p61 = scmp.eq.s32.totalorder %s18, 1
      %p62 = por %p60, %p61
      %p63 = scmp.ne.s32.totalorder %s52, %s53
      %p64 = scmp.eq.s32.totalorder %s18, 0
      %p65 = por %p63, %p64
      %p66 = scmp.ne.s32.totalorder %s52, %s53
      %p67 = scmp.eq.s32.totalorder %s19, 1
      %p68 = por %p66, %p67
      %p70 = scmp.ne.s32.totalorder %s53, %s69
      %p71 = scmp.eq.s32.totalorder %s19, 0
      %p72 = por %p70, %p71
      %s73 = ssub.s32 %s13, %s20
      %p74 = scmp.eq.s32.totalorder %s73, 0
      %s76 = sadd.s32 %s75, 1
      %s77 = scalar_select %p74, %s75, %s76
      %p80 = pneg %p74
      %p81 = scmp.eq.s32.totalorder %s13, 1
      %p82 = por %p80, %p81
      %p83 = scmp.ne.s32.totalorder %s75, %s78
      %p84 = scmp.eq.s32.totalorder %s13, 0
      %p85 = por %p83, %p84
      %p86 = scmp.ne.s32.totalorder %s75, %s78
      %p87 = scmp.eq.s32.totalorder %s18, 1
      %p88 = por %p86, %p87
      %p89 = scmp.ne.s32.totalorder %s78, %s79
      %p90 = scmp.eq.s32.totalorder %s18, 0
      %p91 = por %p89, %p90
      %p92 = scmp.ne.s32.totalorder %s78, %s79
      %p93 = scmp.eq.s32.totalorder %s19, 1
      %p94 = por %p92, %p93
      %p96 = scmp.ne.s32.totalorder %s79, %s95
      %p97 = scmp.eq.s32.totalorder %s19, 0
      %p98 = por %p96, %p97
      %s99 = ssub.s32 %s13, %s20
      %p100 = scmp.eq.s32.totalorder %s99, 0
      %s102 = sadd.s32 %s101, 1
      %s103 = scalar_select %p100, %s101, %s102
      %p106 = pneg %p100
      %p107 = scmp.eq.s32.totalorder %s13, 1
      %p108 = por %p106, %p107
      %p109 = scmp.ne.s32.totalorder %s101, %s104
      %p110 = scmp.eq.s32.totalorder %s13, 0
      %p111 = por %p109, %p110
      %p112 = scmp.ne.s32.totalorder %s101, %s104
      %p113 = scmp.eq.s32.totalorder %s18, 1
      %p114 = por %p112, %p113
      %p115 = scmp.ne.s32.totalorder %s104, %s105
      %p116 = scmp.eq.s32.totalorder %s18, 0
      %p117 = por %p115, %p116
      %p118 = scmp.ne.s32.totalorder %s104, %s105
      %p119 = scmp.eq.s32.totalorder %s19, 1
      %p120 = por %p118, %p119
      %p122 = scmp.ne.s32.totalorder %s105, %s121
      %p123 = scmp.eq.s32.totalorder %s19, 0
      %p124 = por %p122, %p123
      %p125 = scmp.le.s32.totalorder 1, %s13
      %p126 = scmp.lt.s32.totalorder %s13, 3
      %p127 = pnand %p125, %p126
      %p128 = pneg %p127
      // Predicated region
      $region9: #{tpu_custom_call.1} parent=5 // pred_check
        _
      $region10: #{tpu_custom_call.1} parent=5 // pred_check_branch
        %130 = sbr.rel (%p127) target = $region12
      $region11: #{tpu_custom_call.1} parent=5 // pred_region
        %s131 = ssub.s32 %s13, 1
      $region12: #{tpu_custom_call.1} parent=5 // pred_fallthru
        _
      %p132 = scmp.lt.s32.totalorder %s13, 2
      // Predicated region
      $region13: #{tpu_custom_call.1} parent=5 // pred_check
        %p133 = pneg %p132
      $region14: #{tpu_custom_call.1} parent=5 // pred_check_branch
        %135 = sbr.rel (%p133) target = $region16
      $region15: #{tpu_custom_call.1} parent=5 // pred_region
        // Predicated region
        $region17: #{tpu_custom_call.1} parent=15 // pred_check
          %p136 = pneg %p33
        $region18: #{tpu_custom_call.1} parent=15 // pred_check_branch
          %138 = sbr.rel (%p136) target = $region20
        $region19: #{tpu_custom_call.1} parent=15 // pred_region
          %s139 = smul.u32 2, %s13
          %s140 = ssub.s32 3, %s139
          %p141 = scmp.lt.s32.totalorder %s140, 2
          %s142 = scalar_select %p141, %s140, 2
          %s143 = smul.u32 128, %s142
          %p144 = scmp.lt.s32.totalorder %s139, 2
          %s145 = scalar_select %p144, %s139, 2
          %s146 = smul.addr %s145, 8
          %s147 = scalar_lea.vmem %s0, %s146
          %s148 = smul.u32 2, %s13
          %s149 = ssub.s32 3, %s148
          %p150 = scmp.lt.s32.totalorder %s149, 2
          %s151 = scalar_select %p150, %s149, 2
          %s152 = smul.u32 128, %s151
        $region20: #{tpu_custom_call.1} parent=15 // pred_fallthru
          _
        // Predicated region
        $region21: #{tpu_custom_call.1} parent=15 // pred_check
          %p153 = pneg %p59
        $region22: #{tpu_custom_call.1} parent=15 // pred_check_branch
          %155 = sbr.rel (%p153) target = $region24
        $region23: #{tpu_custom_call.1} parent=15 // pred_region
          %s156 = smul.u32 2, %s13
          %s157 = ssub.s32 3, %s156
          %p158 = scmp.lt.s32.totalorder %s157, 2
          %s159 = scalar_select %p158, %s157, 2
          %s160 = smul.u32 128, %s159
          %p161 = scmp.lt.s32.totalorder %s156, 2
          %s162 = scalar_select %p161, %s156, 2
          %s163 = smul.addr %s162, 8
          %s164 = scalar_lea.vmem %s1, %s163
          %s165 = smul.u32 2, %s13
          %s166 = ssub.s32 3, %s165
          %p167 = scmp.lt.s32.totalorder %s166, 2
          %s168 = scalar_select %p167, %s166, 2
          %s169 = smul.u32 128, %s168
        $region24: #{tpu_custom_call.1} parent=15 // pred_fallthru
          _
      $region16: #{tpu_custom_call.1} parent=5 // pred_fallthru
        _
      %p170 = scmp.le.s32.totalorder 1, %s13
      %p171 = scmp.lt.s32.totalorder %s13, 3
      %p172 = pnand %p170, %p171
      %p173 = pneg %p172
      // Predicated region
      $region25: #{tpu_custom_call.1} parent=5 // pred_check
        _
      $region26: #{tpu_custom_call.1} parent=5 // pred_check_branch
        %175 = sbr.rel (%p172) target = $region28
      $region27: #{tpu_custom_call.1} parent=5 // pred_region
        %s176 = ssub.s32 %s13, 1
        %s177 = smul.u32 2, %s18
        %s178 = ssub.s32 3, %s177
        %p179 = scmp.lt.s32.totalorder %s178, 2
        %s180 = scalar_select %p179, %s178, 2
        %s181 = smul.u32 128, %s180
        %p182 = scmp.lt.s32.totalorder %s177, 2
        %s183 = scalar_select %p182, %s177, 2
        %s184 = smul.addr %s183, 8
        %s185 = scalar_lea.vmem %s0, %s184
        %p186 = pneg %p39
        %p187 = pneg %p36
        %s188 = smul.u32 2, %s18
        %s189 = ssub.s32 3, %s188
        %p190 = scmp.lt.s32.totalorder %s189, 2
        %s191 = scalar_select %p190, %s189, 2
        %s192 = smul.u32 128, %s191
        %p193 = scmp.lt.s32.totalorder %s188, 2
        %s194 = scalar_select %p193, %s188, 2
        %s195 = smul.addr %s194, 8
        %s196 = scalar_lea.vmem %s1, %s195
        %p197 = pneg %p65
        %p198 = pneg %p62
        %p199 = pneg %p91
        %p200 = pneg %p88
        %s201 = sand.u32 %s78, 1
        %s202 = scalar_lea.sflag [#allocation3], %s201
        %s203 = sand.u32 %s78, 1
        %s204 = smul.addr %s203, 16
        %s205 = scalar_lea.vmem [#allocation2], %s204
        %p206 = pneg %p117
        %p207 = pneg %p114
        %s208 = sand.u32 %s104, 1
        %s209 = sand.u32 %s104, 1
        %s210 = smul.addr %s209, 16
        %s211 = scalar_lea.vmem [#allocation4], %s210
        %s212 = smul.u32 2, %s18
        %s213 = ssub.s32 3, %s212
        %p214 = scmp.lt.s32.totalorder %s213, 2
        %s215 = scalar_select %p214, %s213, 2
        %s216 = smul.u32 128, %s215
        %p217 = scmp.lt.s32.totalorder %s212, 2
        %s218 = scalar_select %p217, %s212, 2
        %s219 = smul.addr %s218, 8
        %s220 = scalar_lea.vmem %s0, %s219
        %s221 = smul.u32 2, %s18
        %s222 = ssub.s32 3, %s221
        %p223 = scmp.lt.s32.totalorder %s222, 2
        %s224 = scalar_select %p223, %s222, 2
        %s225 = smul.u32 128, %s224
        %s226 = smul.u32 2, %s18
        %s227 = ssub.s32 3, %s226
        %p228 = scmp.lt.s32.totalorder %s227, 2
        %s229 = scalar_select %p228, %s227, 2
        %s230 = smul.u32 128, %s229
        %p231 = scmp.lt.s32.totalorder %s226, 2
        %s232 = scalar_select %p231, %s226, 2
        %s233 = smul.addr %s232, 8
        %s234 = scalar_lea.vmem %s1, %s233
        %s235 = smul.u32 2, %s18
        %s236 = ssub.s32 3, %s235
        %p237 = scmp.lt.s32.totalorder %s236, 2
        %s238 = scalar_select %p237, %s236, 2
        %s239 = smul.u32 128, %s238
        %s240 = smul.u32 2, %s18
        %s241 = ssub.s32 3, %s240
        %p242 = scmp.lt.s32.totalorder %s241, 2
        %s243 = scalar_select %p242, %s241, 2
        %s244 = smul.u32 128, %s243
        %s245 = smul.u32 2, %s18
        %s246 = ssub.s32 3, %s245
        %p247 = scmp.lt.s32.totalorder %s246, 2
        %s248 = scalar_select %p247, %s246, 2
        %s249 = smul.u32 128, %s248
        %v250 = vld [vmem:[%s220] sm:$0xff]
        %v251 = vld [vmem:[%s220 + $0x8] sm:$0xff]
        %v252 = vld [vmem:[%s234] sm:$0xff]
        %v253 = vld [vmem:[%s234 + $0x8] sm:$0xff]
        %vm254 = vcmask 261120
        %v255 = vsel %vm254, %v250, -inf
        %256 = vmax.xlane.f32.xlu0 %v255
        %v257 = vpop.xlane.xlu0 %256
        %v258 = vsel %vm254, %v251, -inf
        %259 = vmax.xlane.f32.xlu0 %v258
        %v260 = vpop.xlane.xlu0 %259
        %v261 = vsub.f32 %v250, %v257
        %v262 = vsub.f32 %v251, %v260
        %v263 = vmul.f32 %v261, 1.442695
        %v264 = vpow.pop %v263
        %v265 = vmul.f32 %v262, 1.442695
        %v266 = vpow.pop %v265
        %v267 = vsel %vm254, %v264, 0.0
        %268 = vadd.xlane.f32.xlu0 %v267
        %v269 = vpop.xlane.xlu0 %268
        %v270 = vsel %vm254, %v266, 0.0
        %271 = vadd.xlane.f32.xlu0 %v270
        %v272 = vpop.xlane.xlu0 %271
        %v273 = vlog2.pop %v269
        %v274 = vmul.f32 %v273, 0.6931472
        %v275 = vlog2.pop %v272
        %v276 = vmul.f32 %v275, 0.6931472
        %v277 = vlaneseq
        %v278 = vand.u32 %v277, 127
        %vm279 = vcmp.ge.s32.totalorder %v278, 16
        %280 = vset.pattern.permute.xlu0 0
        %281 = vperm.xlu0 %280, %v252
        %v282 = vpop.permute.xlu0 %281
        %283 = vset.pattern.permute.xlu0 0
        %284 = vperm.xlu0 %283, %v253
        %v285 = vpop.permute.xlu0 %284
        %vm286 = vcmp.eq.s32.totalorder %v278, %v282
        %vm287 = vcmp.eq.s32.totalorder %v278, %v285
        %v288 = vsel %vm279, 0.00625, 0.0
        %v289 = vsel %vm286, 0.9, %v288
        %v290 = vsel %vm287, 0.9, %v288
        %291 = vst.msk [vmem:[%s205] sm:$0xff] %vm254, %v289
        %292 = vst.msk [vmem:[%s205 + $0x8] sm:$0xff] %vm254, %v290
        %v293 = vmul.f32 %v289, %v261
        %v294 = vmul.f32 %v290, %v262
        %v295 = vsel %vm254, %v293, 0.0
        %296 = vadd.xlane.f32.xlu0 %v295
        %v297 = vpop.xlane.xlu0 %296
        %v298 = vsel %vm254, %v294, 0.0
        %299 = vadd.xlane.f32.xlu0 %v298
        %v300 = vpop.xlane.xlu0 %299
        %vm301 = vcmp.ge.s32.totalorder %v252, 16
        %vm302 = vcmp.ge.s32.totalorder %v253, 16
        %v303 = vsel %vm301, 1, 0
        %v304 = vsel %vm302, 1, 0
        %v305 = vcvt.s32.f32 %v303
        %v306 = vcvt.s32.f32 %v304
        %v307 = vsub.f32 16.0, %v305
        %v308 = vsub.f32 16.0, %v306
        %v309 = vmul.f32 %v307, 0.00625
        %v310 = vmul.f32 %v308, 0.00625
        %v311 = vadd.f32 %v309, 0.9
        %v312 = vadd.f32 %v310, 0.9
        %v313 = vmul.f32 %v274, %v311
        %v314 = vmul.f32 %v276, %v312
        %v315 = vsub.f32 %v297, %v313
        %v316 = vsub.f32 %v300, %v314
        %v317 = vsub.f32 0.0, %v315
        %v318 = vsub.f32 0.0, %v316
        %v319 = vlaneseq
        %v320 = vshrl.u32 %v319, 7
        %v321 = vadd.s32 %v320, 8
        %s322 = smul.u32 %s18, 16
        %v323 = vstv %s322
        %v324 = vadd.s32 %v323, %v320
        %v325 = vadd.s32 %v323, %v321
        %vm326 = vcmp.lt.s32.totalorder %v324, 24
        %vm327 = vcmp.lt.s32.totalorder %v325, 24
        %v328 = vsel %vm326, %v317, 0.0
        %v329 = vsel %vm327, %v318, 0.0
        %vm330 = vcmask 7168
        %331 = vst.msk [vmem:[%s211] sm:$0xff] %vm330, %v328
        %332 = vst.msk [vmem:[%s211 + $0x8] sm:$0xff] %vm330, %v329
        %s333 = sand.u32 %s78, 1
        %s334 = scalar_lea.sflag [#allocation3], %s333
        %s335 = sand.u32 %s78, 1
        %s336 = smul.addr %s335, 16
        %s337 = scalar_lea.vmem [#allocation2], %s336
        %s338 = sand.u32 %s104, 1
        %s339 = sand.u32 %s104, 1
        %s340 = smul.addr %s339, 16
        %s341 = scalar_lea.vmem [#allocation4], %s340
        // Predicated region
        $region29: #{tpu_custom_call.1} parent=27 // pred_check
          %p342 = pneg %p88
        $region30: #{tpu_custom_call.1} parent=27 // pred_check_branch
          %344 = sbr.rel (%p342) target = $region32
        $region31: #{tpu_custom_call.1} parent=27 // pred_region
          %s345 = smul.u32 2, %s18
          %s346 = ssub.s32 3, %s345
          %p347 = scmp.lt.s32.totalorder %s346, 2
          %s348 = scalar_select %p347, %s346, 2
          %s349 = smul.u32 128, %s348
          %s351 = ssub.s32 256, %s349
          %352 = vsyncadd %s334, %s351
          %p353 = scmp.ne.s32.totalorder 0, %s349
          %s354 = smul.addr %s345, 128
          %s355 = scalar_lea.hbm %s2, %s354
          %s356 = smul.u32 8, %s348
          %s357 = sshll.u32 %s337, 4
          %s358 = int_to_ptr.vmem [resolvable:$true] %s357
          %s359 = sshll.u32 %s356, 4
          %363 = dma.vmem_to_hbm [thread:$0]  (%p353), %s358, %s359, %s355, %s334, 128, 128, 8
        $region32: #{tpu_custom_call.1} parent=27 // pred_fallthru
          _
        // Predicated region
        $region33: #{tpu_custom_call.1} parent=27 // pred_check
          %p364 = pneg %p114
        $region34: #{tpu_custom_call.1} parent=27 // pred_check_branch
          %366 = sbr.rel (%p364) target = $region36
        $region35: #{tpu_custom_call.1} parent=27 // pred_region
          %s367 = smul.u32 2, %s18
          %s368 = ssub.s32 3, %s367
          %p369 = scmp.lt.s32.totalorder %s368, 2
          %s370 = scalar_select %p369, %s368, 2
          %s371 = smul.u32 128, %s370
          %p372 = scmp.ne.s32.totalorder 0, %s371
          %s373 = smul.addr %s367, 8
          %s374 = scalar_lea.vmem %s3, %s373
          // Predicated region
          $region37: #{tpu_custom_call.1} parent=35 // pred_check
            %p375 = pneg %p372
          $region38: #{tpu_custom_call.1} parent=35 // pred_check_branch
            %377 = sbr.rel (%p375) target = $region40
          $region39: #{tpu_custom_call.1} parent=35 // pred_region
            // Predicated region
            $region41: #{tpu_custom_call.1} parent=39 // pred_check
              _
            $region42: #{tpu_custom_call.1} parent=39 // pred_check_branch
              %379 = sbr.rel (0) target = $region44
            $region43: #{tpu_custom_call.1} parent=39 // pred_region
              // Predicated region
              $region63: #{tpu_custom_call.1} parent=43 // pred_check
                _
              $region64: #{tpu_custom_call.1} parent=43 // pred_check_branch
                %431 = sbr.rel (0) target = $region66
              $region65: #{tpu_custom_call.1} parent=43 // pred_region
                %s432 = sshrl.u32 %s370, 1
                // While loop
                $region67: #{tpu_custom_call.1} parent=65 // loop_pre_header
                  _
                $region68: #{tpu_custom_call.1} parent=65 // loop_header
                  %s434 = sphi 0, %s436
                  %p435 = scmp.ge.s32.totalorder %s434, %s432
                  %s439 = sphi 0, %s448
                  %s440 = sphi %s341, %s451
                  %s441 = sphi %s374, %s452
                $region69: #{tpu_custom_call.1} parent=65 // loop_header_branch
                  %438 = sbr.rel (%p435) target = $region73
                $region70: #{tpu_custom_call.1} parent=65 // loop_body
                  %v442 = vld [vmem:[%s440] sm:$0xff]
                  %443 = vst [vmem:[%s441] sm:$0xff] %v442
                  %v444 = vld [vmem:[%s440 + $0x8] sm:$0xff]
                  %445 = vst [vmem:[%s441 + $0x8] sm:$0xff] %v444
                  %s446 = sadd.s32 1, %s439
                  %p447 = scmp.ge.s32.totalorder %s446, %s432
                  %s448 = scalar_select %p447, 0, %s446
                  %s449 = smul.u32 %s448, 16
                  %s450 = smul.u32 %s448, 16
                  %s451 = scalar_lea.vmem %s341, %s449 [#allocation4]
                  %s452 = scalar_lea.vmem %s374, %s450
                $region71: #{tpu_custom_call.1} parent=65 // loop_footer
                  %s436 = sadd.s32 %s434, 1
                $region72: #{tpu_custom_call.1} parent=65 // loop_footer_branch
                  %433 = sbr.rel target = $region68
                $region73: #{tpu_custom_call.1} parent=65 // loop_exit
                  _
                %s453 = sshrl.u32 %s370, 1
                %s454 = sand.u32 %s370, 1
                %s455 = smul.u32 %s453, 2
                %s456 = smul.u32 8, %s455
                %s457 = scalar_lea.vmem %s341, %s456 [#allocation4]
                %s458 = smul.u32 8, %s455
                %s459 = scalar_lea.vmem %s374, %s458
                // While loop
                $region74: #{tpu_custom_call.1} parent=65 // loop_pre_header
                  _
                $region75: #{tpu_custom_call.1} parent=65 // loop_header
                  %s461 = sphi 0, %s463
                  %p462 = scmp.ge.s32.totalorder %s461, %s454
                  %s466 = sphi 0, %s473
                  %s467 = sphi %s457, %s476
                  %s468 = sphi %s459, %s477
                $region76: #{tpu_custom_call.1} parent=65 // loop_header_branch
                  %465 = sbr.rel (%p462) target = $region80
                $region77: #{tpu_custom_call.1} parent=65 // loop_body
                  %v469 = vld [vmem:[%s467] sm:$0xff]
                  %470 = vst [vmem:[%s468] sm:$0xff] %v469
                  %s471 = sadd.s32 1, %s466
                  %p472 = scmp.ge.s32.totalorder %s471, %s454
                  %s473 = scalar_select %p472, 0, %s471
                  %s474 = smul.u32 %s473, 8
                  %s475 = smul.u32 %s473, 8
                  %s476 = scalar_lea.vmem %s457, %s474 [#allocation4]
                  %s477 = scalar_lea.vmem %s459, %s475
                $region78: #{tpu_custom_call.1} parent=65 // loop_footer
                  %s463 = sadd.s32 %s461, 1
                $region79: #{tpu_custom_call.1} parent=65 // loop_footer_branch
                  %460 = sbr.rel target = $region75
                $region80: #{tpu_custom_call.1} parent=65 // loop_exit
                  _
              $region66: #{tpu_custom_call.1} parent=43 // pred_fallthru
                _
              // Predicated region
              $region81: #{tpu_custom_call.1} parent=43 // pred_check
                _
              $region82: #{tpu_custom_call.1} parent=43 // pred_check_branch
                %479 = sbr.rel target = $region84
              $region83: #{tpu_custom_call.1} parent=43 // pred_region
                _
              $region84: #{tpu_custom_call.1} parent=43 // pred_fallthru
                _
            $region44: #{tpu_custom_call.1} parent=39 // pred_fallthru
              _
            // Predicated region
            $region45: #{tpu_custom_call.1} parent=39 // pred_check
              _
            $region46: #{tpu_custom_call.1} parent=39 // pred_check_branch
              %381 = sbr.rel target = $region48
            $region47: #{tpu_custom_call.1} parent=39 // pred_region
              %s383 = ssub.s32 256, 1
              %s384 = sshrl.u32 %s370, 1
              // While loop
              $region49: #{tpu_custom_call.1} parent=47 // loop_pre_header
                _
              $region50: #{tpu_custom_call.1} parent=47 // loop_header
                %s386 = sphi 0, %s388
                %p387 = scmp.ge.s32.totalorder %s386, %s384
                %s391 = sphi 0, %s400
                %s392 = sphi %s341, %s403
                %s393 = sphi %s374, %s404
              $region51: #{tpu_custom_call.1} parent=47 // loop_header_branch
                %390 = sbr.rel (%p387) target = $region55
              $region52: #{tpu_custom_call.1} parent=47 // loop_body
                %v394 = vld [vmem:[%s392] sm:%s383]
                %395 = vst [vmem:[%s393] sm:%s383] %v394
                %v396 = vld [vmem:[%s392 + $0x8] sm:%s383]
                %397 = vst [vmem:[%s393 + $0x8] sm:%s383] %v396
                %s398 = sadd.s32 1, %s391
                %p399 = scmp.ge.s32.totalorder %s398, %s384
                %s400 = scalar_select %p399, 0, %s398
                %s401 = smul.u32 %s400, 16
                %s402 = smul.u32 %s400, 16
                %s403 = scalar_lea.vmem %s341, %s401 [#allocation4]
                %s404 = scalar_lea.vmem %s374, %s402
              $region53: #{tpu_custom_call.1} parent=47 // loop_footer
                %s388 = sadd.s32 %s386, 1
              $region54: #{tpu_custom_call.1} parent=47 // loop_footer_branch
                %385 = sbr.rel target = $region50
              $region55: #{tpu_custom_call.1} parent=47 // loop_exit
                _
              %s405 = sshrl.u32 %s370, 1
              %s406 = sand.u32 %s370, 1
              %s407 = smul.u32 %s405, 2
              %s408 = smul.u32 8, %s407
              %s409 = scalar_lea.vmem %s341, %s408 [#allocation4]
              %s410 = smul.u32 8, %s407
              %s411 = scalar_lea.vmem %s374, %s410
              // While loop
              $region56: #{tpu_custom_call.1} parent=47 // loop_pre_header
                _
              $region57: #{tpu_custom_call.1} parent=47 // loop_header
                %s413 = sphi 0, %s415
                %p414 = scmp.ge.s32.totalorder %s413, %s406
                %s418 = sphi 0, %s425
                %s419 = sphi %s409, %s428
                %s420 = sphi %s411, %s429
              $region58: #{tpu_custom_call.1} parent=47 // loop_header_branch
                %417 = sbr.rel (%p414) target = $region62
              $region59: #{tpu_custom_call.1} parent=47 // loop_body
                %v421 = vld [vmem:[%s419] sm:%s383]
                %422 = vst [vmem:[%s420] sm:%s383] %v421
                %s423 = sadd.s32 1, %s418
                %p424 = scmp.ge.s32.totalorder %s423, %s406
                %s425 = scalar_select %p424, 0, %s423
                %s426 = smul.u32 %s425, 8
                %s427 = smul.u32 %s425, 8
                %s428 = scalar_lea.vmem %s409, %s426 [#allocation4]
                %s429 = scalar_lea.vmem %s411, %s427
              $region60: #{tpu_custom_call.1} parent=47 // loop_footer
                %s415 = sadd.s32 %s413, 1
              $region61: #{tpu_custom_call.1} parent=47 // loop_footer_branch
                %412 = sbr.rel target = $region57
              $region62: #{tpu_custom_call.1} parent=47 // loop_exit
                _
            $region48: #{tpu_custom_call.1} parent=39 // pred_fallthru
              _
          $region40: #{tpu_custom_call.1} parent=35 // pred_fallthru
            _
          %480 = vnop
        $region36: #{tpu_custom_call.1} parent=27 // pred_fallthru
          _
      $region28: #{tpu_custom_call.1} parent=5 // pred_fallthru
        _
      %p481 = scmp.le.s32.totalorder 2, %s13
      // Predicated region
      $region85: #{tpu_custom_call.1} parent=5 // pred_check
        %p482 = pneg %p481
      $region86: #{tpu_custom_call.1} parent=5 // pred_check_branch
        %484 = sbr.rel (%p482) target = $region88
      $region87: #{tpu_custom_call.1} parent=5 // pred_region
        %s485 = ssub.s32 %s13, 2
        // Predicated region
        $region89: #{tpu_custom_call.1} parent=87 // pred_check
          %p486 = pneg %p94
        $region90: #{tpu_custom_call.1} parent=87 // pred_check_branch
          %488 = sbr.rel (%p486) target = $region92
        $region91: #{tpu_custom_call.1} parent=87 // pred_region
          %s489 = sand.u32 %s79, 1
          %s490 = scalar_lea.sflag [#allocation3], %s489
          %s491 = sand.u32 %s79, 1
          %s492 = smul.addr %s491, 16
          %s493 = scalar_lea.vmem [#allocation2], %s492
          %494 = dma.done %s490, 256
        $region92: #{tpu_custom_call.1} parent=87 // pred_fallthru
          _
        // Predicated region
        $region93: #{tpu_custom_call.1} parent=87 // pred_check
          %p495 = pneg %p120
        $region94: #{tpu_custom_call.1} parent=87 // pred_check_branch
          %497 = sbr.rel (%p495) target = $region96
        $region95: #{tpu_custom_call.1} parent=87 // pred_region
          %s498 = sand.u32 %s105, 1
          %s499 = sand.u32 %s105, 1
          %s500 = smul.addr %s499, 16
          %s501 = scalar_lea.vmem [#allocation4], %s500
        $region96: #{tpu_custom_call.1} parent=87 // pred_fallthru
          _
      $region88: #{tpu_custom_call.1} parent=5 // pred_fallthru
        _
    $region6: #{tpu_custom_call.1} parent=1 // loop_footer
      %s17 = sadd.s32 1, %s13
    $region7: #{tpu_custom_call.1} parent=1 // loop_footer_branch
      %12 = sbr.rel target = $region3
    $region8: #{tpu_custom_call.1} parent=1 // loop_exit
      _
    %502 = vsyncpa [#allocation3], 1
    %s503 = scalar_lea.sflag [#allocation3], 1
    %504 = vsyncpa %s503, 1

</llo_original>
